<compile_context>
chip_gen: v7x
topology: tpu7x:2x2x1
jax: 0.10.0
libtpu: 0.0.40
codegen_flags: <defaults>
</compile_context>

<pallas_src>
import functools
import math

import jax
import jax.numpy as jnp
from jax.experimental import pallas as pl
from jax.experimental.pallas import tpu as pltpu

LANES = 128


def _kk_kernel(w_ref, x_ref, o_ref, *, mind_k):
    # output = mind_k + x * weight ; weight is an fp32 scalar read from SMEM,
    # mind_k is an immediate constant baked into the kernel.
    w = w_ref[0]
    acc = x_ref[...].astype(jnp.float32) * w + jnp.float32(mind_k)
    o_ref[...] = acc.astype(o_ref.dtype)


def kk_forward(x, weight, mind_k):
    """output = mind_k + input * weight   (weight: shape-(1,) fp32 parameter)."""
    orig_shape = x.shape
    n = x.size
    in_dtype = x.dtype
    # Integer inputs promote to float (matching PyTorch's promotion vs. the
    # fp32 parameter); float inputs keep their dtype.
    out_dtype = in_dtype if jnp.issubdtype(in_dtype, jnp.floating) else jnp.float32

    itemsize = jnp.dtype(in_dtype).itemsize
    # Sub-32-bit dtypes pack along sublanes: keep tile rows a multiple of the
    # packed sublane count (8 f32, 16 bf16, 32 int8/fp8) so stores stay
    # full unmasked vst's.
    sub_mult = 8 * max(1, 4 // itemsize)

    # Lane-dense 2D view: (rows, 128).
    rows = pl.cdiv(n, LANES)
    needs_pad = (rows * LANES) != n

    flat = jnp.ravel(x)
    if needs_pad:
        # Only when n is not a multiple of 128: pad to the next lane multiple.
        flat = jnp.pad(flat, (0, rows * LANES - n))
    x2d = flat.reshape(rows, LANES)

    # ~4 MiB input blocks (8192 rows for f32, 16384 for bf16, ...).
    max_tile_rows = max(
        sub_mult, ((4 << 20) // (LANES * itemsize)) // sub_mult * sub_mult)

    if rows > max_tile_rows:
        tr = max_tile_rows
    else:
        # Split mid-size inputs into >= 2 grid steps so megacore (v7x: 2 TCs)
        # can shard the parallel axis across both cores.
        tr = pl.cdiv(pl.cdiv(rows, 2), sub_mult) * sub_mult
        tr = min(tr, rows)  # tiny inputs: a single full-extent block
    grid = (pl.cdiv(rows, tr),)

    cost = pl.CostEstimate(
        flops=2 * n,
        transcendentals=0,
        bytes_accessed=n * itemsize + n * jnp.dtype(out_dtype).itemsize,
    )

    out2d = pl.pallas_call(
        functools.partial(_kk_kernel, mind_k=float(mind_k)),
        out_shape=jax.ShapeDtypeStruct((rows, LANES), out_dtype),
        grid=grid,
        in_specs=[
            # fp32 scalar weight, untiled, in scalar memory.
            pl.BlockSpec(memory_space=pltpu.MemorySpace.SMEM),
            # Lane-dense input tile; ragged last block is masked by Pallas.
            pl.BlockSpec((tr, LANES), lambda i: (i, 0)),
        ],
        out_specs=pl.BlockSpec((tr, LANES), lambda i: (i, 0)),
        compiler_params=pltpu.CompilerParams(
            dimension_semantics=("parallel",),
            vmem_limit_bytes=48 * 1024 * 1024,
        ),
        cost_estimate=cost,
    )(weight.astype(jnp.float32), x2d)

    out_flat = out2d.reshape(-1)
    if needs_pad:
        out_flat = out_flat[:n]
    return out_flat.reshape(orig_shape)


if __name__ == "__main__":
    key = jax.random.PRNGKey(0)
    wkey, xkey = jax.random.split(key)

    # Module constructor args and parameter init mirroring the PyTorch code:
    #   mind_k = (max_k + min_k) / 2 ; weight ~ U(-stdv, stdv), stdv = 1/sqrt(1)
    max_k, min_k = 10.0, 2.0
    mind_k = (max_k + min_k) / 2.0
    stdv = 1.0 / math.sqrt(1)
    weight = jax.random.uniform(wkey, (1,), jnp.float32,
                                minval=-stdv, maxval=stdv)

    x = jax.random.normal(xkey, (2, 4, 16, 16), jnp.float32)

    fwd = jax.jit(functools.partial(kk_forward, mind_k=mind_k))
    out = jax.block_until_ready(fwd(x, weight))

    ref = mind_k + x * weight[0]
    assert out.shape == x.shape
    assert out.dtype == x.dtype
    assert bool(jnp.all(jnp.isfinite(out)))
    assert bool(jnp.allclose(out, ref, atol=1e-6, rtol=1e-6))
    print("KERNEL_OK")
</pallas_src>

<mosaic_0001>
module attributes {stable_mosaic.version = 11 : i64} {
  func.func @_kk_kernel(%arg0: i32, %arg1: memref<1xf32, #tpu.memory_space<smem>>, %arg2: memref<8x128xf32, #tpu.memory_space<vmem>>, %arg3: memref<8x128xf32, #tpu.memory_space<vmem>>) attributes {dimension_semantics = [#tpu.dimension_semantics<parallel>], iteration_bounds = array<i64: 2>, scalar_prefetch = 0 : i64, scratch_operands = 0 : i64, tpu.core_type = #tpu.core_type<tc>, window_params = [{transform_indices = @transform_0, window_bounds = array<i64: 1>}, {transform_indices = @transform_1, window_bounds = array<i64: 8, 128>}, {transform_indices = @transform_2, window_bounds = array<i64: 8, 128>}]} {
    %c0 = arith.constant 0 : index
    %0 = memref.load %arg1[%c0] : memref<1xf32, #tpu.memory_space<smem>>
    %c0_0 = arith.constant 0 : index
    %c0_1 = arith.constant 0 : index
    %1 = vector.load %arg2[%c0_0, %c0_1] : memref<8x128xf32, #tpu.memory_space<vmem>>, vector<8x128xf32>
    %2 = vector.broadcast %0 : f32 to vector<8x128xf32>
    %3 = arith.mulf %1, %2 : vector<8x128xf32>
    %cst = arith.constant 6.000000e+00 : f32
    %4 = vector.broadcast %cst : f32 to vector<8x128xf32>
    %5 = arith.addf %3, %4 : vector<8x128xf32>
    %c0_2 = arith.constant 0 : index
    %c0_3 = arith.constant 0 : index
    %6 = vector.load %arg3[%c0_2, %c0_3] : memref<8x128xf32, #tpu.memory_space<vmem>>, vector<8x128xf32>
    tpu.vector_store %arg3[%c0_2, %c0_3], %5 {strides = array<i32>} : memref<8x128xf32, #tpu.memory_space<vmem>>, vector<8x128xf32>,
    return
  }
  func.func @transform_0(%arg0: i32) -> i32 {
    %c0_i32 = arith.constant 0 : i32
    %c0_i32_0 = arith.constant 0 : i32
    return %c0_i32 : i32
  }
  func.func @transform_1(%arg0: i32) -> (i32, i32) {
    %c0_i32 = arith.constant 0 : i32
    %c0_i32_0 = arith.constant 0 : i32
    return %arg0, %c0_i32 : i32, i32
  }
  func.func @transform_2(%arg0: i32) -> (i32, i32) {
    %c0_i32 = arith.constant 0 : i32
    %c0_i32_0 = arith.constant 0 : i32
    return %arg0, %c0_i32 : i32, i32
  }
}

</mosaic_0001>

<llo_original>
// kernel: kk_forward.1
$region0: #{kk_forward.1}
  #allocation0 [shape = 'u32[]', space=smem, size = 0x4, offset = 0x4, fixed_abs, tag = 'smem constant byte address 0x4 - core index']
  #allocation1 [shape = 'u32[144,128]{1,0:T(1,128)}', space=vmem, size = 0x12000, scoped, tag = 'internal scratch']
  #allocation2 [shape = 'f32[1]{0:T(128)S(6)}', space=smem, size = 0x200, scoped, tag = 'scoped memory for kk_forward.1']
  %s0 = inlined_call_operand.<no memory space> [shape: f32[1], index: 0, kind: input, shape index: {}]
  %s1 = inlined_call_operand.vmem [shape: f32[16,128], index: 1, kind: input, shape index: {}]
  %s2 = inlined_call_operand.vmem [shape: f32[16,128], index: 2, kind: output, shape index: {}]
  %s3 = sld [smem:[#allocation0]]
  $region41: #{kk_forward.1} parent=0
    _
  %s5 = ssub.s32 1, %s3
  %s6 = scalar_select 0, %s5, %s3
  %7 = sst [smem:[#allocation2]] %s0
  loop: start=0, step=1, limit=4
  $region2: #{kk_forward.1} parent=0 // loop_pre_header
    _
  $region3: #{kk_forward.1} parent=0 // loop_header
    %s9 = sphi 0, %s13
    %p10 = scmp.ge.s32.totalorder %s9, 4
    %s17 = sphi 0, %s17
    %s19 = sphi 0, %s17
    %s20 = sphi 0, %s19
    %s34 = sphi 0, %s20
    %s40 = sphi 0, %s42
    %s43 = sphi 0, %s40
    %s44 = sphi 0, %s43
    %s60 = sphi 0, %s44
    %s66 = sphi 0, %s68
    %s69 = sphi 0, %s66
    %s70 = sphi 0, %s69
    %s86 = sphi 0, %s70
  $region4: #{kk_forward.1} parent=0 // loop_header_branch
    %12 = sbr.rel (%p10) target = $region8
  $region5: #{kk_forward.1} parent=0 // loop_body
    %s14 = ssub.s32 %s9, 1
    %s15 = ssub.s32 %s9, 2
    %s16 = sadd.s32 %s9, 1
    %s18 = sadd.s32 %s17, 1
    %p21 = scmp.eq.s32.totalorder %s9, 1
    %p22 = scmp.ne.s32.totalorder %s17, %s19
    %p23 = scmp.eq.s32.totalorder %s9, 0
    %p24 = por %p22, %p23
    %p25 = scmp.ne.s32.totalorder %s17, %s19
    %p26 = scmp.eq.s32.totalorder %s14, 1
    %p27 = por %p25, %p26
    %p28 = scmp.ne.s32.totalorder %s19, %s20
    %p29 = scmp.eq.s32.totalorder %s14, 0
    %p30 = por %p28, %p29
    %p31 = scmp.ne.s32.totalorder %s19, %s20
    %p32 = scmp.eq.s32.totalorder %s15, 1
    %p33 = por %p31, %p32
    %p35 = scmp.ne.s32.totalorder %s20, %s34
    %p36 = scmp.eq.s32.totalorder %s15, 0
    %p37 = por %p35, %p36
    %s38 = ssub.s32 %s9, %s16
    %p39 = scmp.eq.s32.totalorder %s38, 0
    %s41 = sadd.s32 %s40, 1
    %s42 = scalar_select %p39, %s40, %s41
    %p45 = pneg %p39
    %p46 = scmp.eq.s32.totalorder %s9, 1
    %p47 = por %p45, %p46
    %p48 = scmp.ne.s32.totalorder %s40, %s43
    %p49 = scmp.eq.s32.totalorder %s9, 0
    %p50 = por %p48, %p49
    %p51 = scmp.ne.s32.totalorder %s40, %s43
    %p52 = scmp.eq.s32.totalorder %s14, 1
    %p53 = por %p51, %p52
    %p54 = scmp.ne.s32.totalorder %s43, %s44
    %p55 = scmp.eq.s32.totalorder %s14, 0
    %p56 = por %p54, %p55
    %p57 = scmp.ne.s32.totalorder %s43, %s44
    %p58 = scmp.eq.s32.totalorder %s15, 1
    %p59 = por %p57, %p58
    %p61 = scmp.ne.s32.totalorder %s44, %s60
    %p62 = scmp.eq.s32.totalorder %s15, 0
    %p63 = por %p61, %p62
    %s64 = ssub.s32 %s9, %s16
    %p65 = scmp.eq.s32.totalorder %s64, 0
    %s67 = sadd.s32 %s66, 1
    %s68 = scalar_select %p65, %s66, %s67
    %p71 = pneg %p65
    %p72 = scmp.eq.s32.totalorder %s9, 1
    %p73 = por %p71, %p72
    %p74 = scmp.ne.s32.totalorder %s66, %s69
    %p75 = scmp.eq.s32.totalorder %s9, 0
    %p76 = por %p74, %p75
    %p77 = scmp.ne.s32.totalorder %s66, %s69
    %p78 = scmp.eq.s32.totalorder %s14, 1
    %p79 = por %p77, %p78
    %p80 = scmp.ne.s32.totalorder %s69, %s70
    %p81 = scmp.eq.s32.totalorder %s14, 0
    %p82 = por %p80, %p81
    %p83 = scmp.ne.s32.totalorder %s69, %s70
    %p84 = scmp.eq.s32.totalorder %s15, 1
    %p85 = por %p83, %p84
    %p87 = scmp.ne.s32.totalorder %s70, %s86
    %p88 = scmp.eq.s32.totalorder %s15, 0
    %p89 = por %p87, %p88
    %p90 = scmp.le.s32.totalorder 1, %s9
    %p91 = scmp.lt.s32.totalorder %s9, 3
    %p92 = pnand %p90, %p91
    %p93 = pneg %p92
    // Predicated region
    $region9: #{kk_forward.1} parent=5 // pred_check
      _
    $region10: #{kk_forward.1} parent=5 // pred_check_branch
      %95 = sbr.rel (%p92) target = $region12
    $region11: #{kk_forward.1} parent=5 // pred_region
      %s96 = ssub.s32 %s9, 1
      // Predicated region
      $region13: #{kk_forward.1} parent=11 // pred_check
        %p97 = pneg %p30
      $region14: #{kk_forward.1} parent=11 // pred_check_branch
        %99 = sbr.rel (%p97) target = $region16
      $region15: #{kk_forward.1} parent=11 // pred_region
        _
      $region16: #{kk_forward.1} parent=11 // pred_fallthru
        _
    $region12: #{kk_forward.1} parent=5 // pred_fallthru
      _
    %p100 = scmp.lt.s32.totalorder %s9, 2
    // Predicated region
    $region17: #{kk_forward.1} parent=5 // pred_check
      %p101 = pneg %p100
    $region18: #{kk_forward.1} parent=5 // pred_check_branch
      %103 = sbr.rel (%p101) target = $region20
    $region19: #{kk_forward.1} parent=5 // pred_region
      // Predicated region
      $region21: #{kk_forward.1} parent=19 // pred_check
        %p104 = pneg %p50
      $region22: #{kk_forward.1} parent=19 // pred_check_branch
        %106 = sbr.rel (%p104) target = $region24
      $region23: #{kk_forward.1} parent=19 // pred_region
        %p107 = scmp.lt.s32.totalorder %s9, 1
        %s108 = scalar_select %p107, %s9, 1
        %s109 = smul.addr %s108, 8
        %s110 = scalar_lea.vmem %s1, %s109
      $region24: #{kk_forward.1} parent=19 // pred_fallthru
        _
    $region20: #{kk_forward.1} parent=5 // pred_fallthru
      _
    %p111 = scmp.le.s32.totalorder 1, %s9
    %p112 = scmp.lt.s32.totalorder %s9, 3
    %p113 = pnand %p111, %p112
    %p114 = pneg %p113
    // Predicated region
    $region25: #{kk_forward.1} parent=5 // pred_check
      _
    $region26: #{kk_forward.1} parent=5 // pred_check_branch
      %116 = sbr.rel (%p113) target = $region28
    $region27: #{kk_forward.1} parent=5 // pred_region
      %s117 = ssub.s32 %s9, 1
      %p118 = pneg %p30
      %p119 = pneg %p27
      %p120 = scmp.lt.s32.totalorder %s14, 1
      %s121 = scalar_select %p120, %s14, 1
      %s122 = smul.addr %s121, 8
      %s123 = scalar_lea.vmem %s1, %s122
      %p124 = pneg %p56
      %p125 = pneg %p53
      %p126 = pneg %p82
      %p127 = pneg %p79
      %p128 = scmp.lt.s32.totalorder %s14, 1
      %s129 = scalar_select %p128, %s14, 1
      %s130 = smul.addr %s129, 8
      %s131 = scalar_lea.vmem %s2, %s130
      %p132 = scmp.lt.s32.totalorder %s14, 1
      %s133 = scalar_select %p132, %s14, 1
      %s134 = smul.addr %s133, 8
      %s135 = scalar_lea.vmem %s1, %s134
      %p136 = scmp.lt.s32.totalorder %s14, 1
      %s137 = scalar_select %p136, %s14, 1
      %s138 = smul.addr %s137, 8
      %s139 = scalar_lea.vmem %s2, %s138
      %s140 = sld [smem:[#allocation2]]
      %v141 = vld [vmem:[%s135] sm:$0xff]
      %v142 = vstv %s140
      %v143 = vmul.f32 %v141, %v142
      %v144 = vadd.f32 %v143, 6.0
      %145 = vst [vmem:[%s139] sm:$0xff] %v144
      %p146 = scmp.lt.s32.totalorder %s14, 1
      %s147 = scalar_select %p146, %s14, 1
      %s148 = smul.addr %s147, 8
      %s149 = scalar_lea.vmem %s2, %s148
      // Predicated region
      $region29: #{kk_forward.1} parent=27 // pred_check
        %p150 = pneg %p79
      $region30: #{kk_forward.1} parent=27 // pred_check_branch
        %152 = sbr.rel (%p150) target = $region32
      $region31: #{kk_forward.1} parent=27 // pred_region
        _
      $region32: #{kk_forward.1} parent=27 // pred_fallthru
        _
    $region28: #{kk_forward.1} parent=5 // pred_fallthru
      _
    %p153 = scmp.le.s32.totalorder 2, %s9
    // Predicated region
    $region33: #{kk_forward.1} parent=5 // pred_check
      %p154 = pneg %p153
    $region34: #{kk_forward.1} parent=5 // pred_check_branch
      %156 = sbr.rel (%p154) target = $region36
    $region35: #{kk_forward.1} parent=5 // pred_region
      %s157 = ssub.s32 %s9, 2
      // Predicated region
      $region37: #{kk_forward.1} parent=35 // pred_check
        %p158 = pneg %p85
      $region38: #{kk_forward.1} parent=35 // pred_check_branch
        %160 = sbr.rel (%p158) target = $region40
      $region39: #{kk_forward.1} parent=35 // pred_region
        %p161 = scmp.lt.s32.totalorder %s15, 1
        %s162 = scalar_select %p161, %s15, 1
        %s163 = smul.addr %s162, 8
        %s164 = scalar_lea.vmem %s2, %s163
      $region40: #{kk_forward.1} parent=35 // pred_fallthru
        _
    $region36: #{kk_forward.1} parent=5 // pred_fallthru
      _
  $region6: #{kk_forward.1} parent=0 // loop_footer
    %s13 = sadd.s32 1, %s9
  $region7: #{kk_forward.1} parent=0 // loop_footer_branch
    %8 = sbr.rel target = $region3
  $region8: #{kk_forward.1} parent=0 // loop_exit
    _

</llo_original>
